<compile_context>
chip_gen: v7x
topology: tpu7x:2x2x1
jax: 0.10.0
libtpu: 0.0.40
codegen_flags: <defaults>
</compile_context>

<pallas_src>
import functools

import jax
import jax.numpy as jnp
from jax import lax
from jax.experimental import pallas as pl
from jax.experimental.pallas import tpu as pltpu

HIDDEN = 512


def _mlp_kernel(x_ref, w1_ref, b1_ref, w2t_ref, b2_ref, o_ref):
    # fc1: (tile_b, d_in) bf16 @ (d_in, 512) bf16 -> f32 accumulation on the MXU.
    h = jnp.dot(x_ref[...], w1_ref[...], preferred_element_type=jnp.float32)
    h = jnp.maximum(h + b1_ref[...], 0.0)      # b1 is (1, 512): broadcasts over rows
    h = h.astype(jnp.bfloat16)                 # halve operand traffic into fc2

    # fc2, transposed: contract last dims of (d_out, 512) and (tile_b, 512)
    # -> (d_out, tile_b).  Output block is lane-dense (last dim = tile_b = 128·k)
    # with no in-kernel relayout/reshape.
    out_t = lax.dot_general(
        w2t_ref[...], h,
        dimension_numbers=(((1,), (1,)), ((), ())),
        preferred_element_type=jnp.float32,
    )
    o_ref[...] = (out_t + b2_ref[...]).astype(o_ref.dtype)   # b2 is (d_out, 1)


@functools.partial(jax.jit, static_argnames=("tile_b",))
def output_layer_forward(x, w1, b1, w2, b2, *, tile_b=128):
    """Pallas implementation of OutputLayer.forward.

    x  : (B, input_dim) float32
    w1 : (input_dim, 512)  b1 : (512,)
    w2 : (512, output_dim) b2 : (output_dim,)
    returns (B, output_dim) float32
    """
    if x.ndim != 2 or x.shape[1] != w1.shape[0]:
        raise ValueError(
            f"Expected input tensor of shape (batch_size, {w1.shape[0]}), got {x.shape}.")
    B, d_in = x.shape
    d_out = w2.shape[1]
    assert tile_b % 128 == 0, "tile_b must be a multiple of 128 (lane-dense output)"

    # Pad the batch to a multiple of tile_b (padding rows are sliced off at the end).
    b_pad = ((B + tile_b - 1) // tile_b) * tile_b
    if b_pad != B:
        x = jnp.pad(x, ((0, b_pad - B), (0, 0)))

    # bf16 operands (MXU-native on v5e/v6e/v7x), f32 accumulation inside the kernel.
    x_bf = x.astype(jnp.bfloat16)
    w1_bf = w1.astype(jnp.bfloat16)
    w2t_bf = w2.T.astype(jnp.bfloat16)                   # (d_out, 512)
    b1_row = b1.reshape(1, HIDDEN).astype(jnp.float32)   # (1, 512)
    b2_col = b2.reshape(d_out, 1).astype(jnp.float32)    # (d_out, 1)

    grid = (b_pad // tile_b,)
    # TODO(synk): on v7x with very large input_dim, single-buffer the resident
    # weight BlockSpecs (pipeline_mode=pl.Buffered(1)); at these sizes the explicit
    # vmem_limit_bytes below is plenty.
    out_t = pl.pallas_call(
        _mlp_kernel,
        out_shape=jax.ShapeDtypeStruct((d_out, b_pad), jnp.float32),
        grid_spec=pltpu.PrefetchScalarGridSpec(
            num_scalar_prefetch=0,
            grid=grid,
            in_specs=[
                pl.BlockSpec((tile_b, d_in), lambda i: (i, 0)),   # x tile
                pl.BlockSpec((d_in, HIDDEN), lambda i: (0, 0)),   # W1 (resident)
                pl.BlockSpec((1, HIDDEN), lambda i: (0, 0)),      # b1
                pl.BlockSpec((d_out, HIDDEN), lambda i: (0, 0)),  # W2^T (resident)
                pl.BlockSpec((d_out, 1), lambda i: (0, 0)),       # b2 (column)
            ],
            out_specs=pl.BlockSpec((d_out, tile_b), lambda i: (0, i)),
        ),
        compiler_params=pltpu.CompilerParams(
            dimension_semantics=("parallel",),       # batch tiles shard across TCs
            vmem_limit_bytes=32 * 1024 * 1024,
        ),
    )(x_bf, w1_bf, b1_row, w2t_bf, b2_col)

    # (d_out, b_pad) -> (B, d_out); transposing the tiny 2-row result is cheap in XLA.
    return out_t[:, :B].T


def init_params(key, input_dim, output_dim=2):
    """Deterministic synthetic params mirroring nn.Linear shapes/init."""
    k1, k2, k3, k4 = jax.random.split(key, 4)
    lim1 = 1.0 / jnp.sqrt(jnp.float32(input_dim))
    lim2 = 1.0 / jnp.sqrt(jnp.float32(HIDDEN))
    w1 = jax.random.uniform(k1, (input_dim, HIDDEN), jnp.float32, -lim1, lim1)
    b1 = jax.random.uniform(k2, (HIDDEN,), jnp.float32, -lim1, lim1)
    w2 = jax.random.uniform(k3, (HIDDEN, output_dim), jnp.float32, -lim2, lim2)
    b2 = jax.random.uniform(k4, (output_dim,), jnp.float32, -lim2, lim2)
    return w1, b1, w2, b2


def reference_forward(x, w1, b1, w2, b2):
    h = jnp.maximum(x @ w1 + b1, 0.0)
    return h @ w2 + b2


if __name__ == "__main__":
    key = jax.random.PRNGKey(0)
    kx, kp = jax.random.split(key)

    # Non-multiple batch exercises the padding path; 200 -> padded 256 -> 2 grid steps.
    batch, input_dim, output_dim = 200, 32, 2
    x = jax.random.normal(kx, (batch, input_dim), jnp.float32)
    w1, b1, w2, b2 = init_params(kp, input_dim, output_dim)

    out = output_layer_forward(x, w1, b1, w2, b2, tile_b=128)
    out = jax.block_until_ready(out)

    ref = reference_forward(x, w1, b1, w2, b2)
    assert out.shape == (batch, output_dim), out.shape
    # bf16 operands + f32 accumulation: compare against the f32 reference with a
    # bf16-appropriate tolerance.
    max_err = float(jnp.max(jnp.abs(out - ref)))
    assert jnp.allclose(out, ref, atol=3e-2, rtol=3e-2), f"mismatch, max_err={max_err}"
    print("KERNEL_OK")
</pallas_src>

<mosaic_0001>
module attributes {stable_mosaic.version = 11 : i64} {
  func.func @_mlp_kernel(%arg0: i32, %arg1: memref<128x32xbf16, #tpu.memory_space<vmem>>, %arg2: memref<32x512xbf16, #tpu.memory_space<vmem>>, %arg3: memref<1x512xf32, #tpu.memory_space<vmem>>, %arg4: memref<2x512xbf16, #tpu.memory_space<vmem>>, %arg5: memref<2x1xf32, #tpu.memory_space<vmem>>, %arg6: memref<2x128xf32, #tpu.memory_space<vmem>>) attributes {dimension_semantics = [#tpu.dimension_semantics<parallel>], iteration_bounds = array<i64: 2>, scalar_prefetch = 0 : i64, scratch_operands = 0 : i64, tpu.core_type = #tpu.core_type<tc>, window_params = [{transform_indices = @transform_0, window_bounds = array<i64: 128, 32>}, {pipeline_mode = #tpu.pipeline_mode<synchronous>, transform_indices = @transform_1, window_bounds = array<i64: 32, 512>}, {pipeline_mode = #tpu.pipeline_mode<synchronous>, transform_indices = @transform_2, window_bounds = array<i64: 1, 512>}, {pipeline_mode = #tpu.pipeline_mode<synchronous>, transform_indices = @transform_3, window_bounds = array<i64: 2, 512>}, {pipeline_mode = #tpu.pipeline_mode<synchronous>, transform_indices = @transform_4, window_bounds = array<i64: 2, 1>}, {transform_indices = @transform_5, window_bounds = array<i64: 2, 128>}]} {
    %c0 = arith.constant 0 : index
    %c0_0 = arith.constant 0 : index
    %0 = vector.load %arg1[%c0, %c0_0] : memref<128x32xbf16, #tpu.memory_space<vmem>>, vector<128x32xbf16>
    %c0_1 = arith.constant 0 : index
    %c0_2 = arith.constant 0 : index
    %1 = vector.load %arg2[%c0_1, %c0_2] : memref<32x512xbf16, #tpu.memory_space<vmem>>, vector<32x512xbf16>
    %cst = arith.constant dense<0.000000e+00> : vector<128x512xf32>
    %2 = tpu.matmul %0, %1, %cst {dimension_numbers = #tpu.dot_dimension_numbers<[1], [0], [0], [1], [0, 0, 1, 1], [], []>} : vector<128x32xbf16>, vector<32x512xbf16>, vector<128x512xf32> -> vector<128x512xf32>
    %c0_3 = arith.constant 0 : index
    %c0_4 = arith.constant 0 : index
    %3 = vector.load %arg3[%c0_3, %c0_4] : memref<1x512xf32, #tpu.memory_space<vmem>>, vector<1x512xf32>
    %4 = vector.broadcast %3 : vector<1x512xf32> to vector<128x512xf32>
    %5 = arith.addf %2, %4 : vector<128x512xf32>
    %cst_5 = arith.constant 0.000000e+00 : f32
    %6 = vector.broadcast %cst_5 : f32 to vector<128x512xf32>
    %7 = arith.maximumf %5, %6 : vector<128x512xf32>
    %8 = arith.truncf %7 : vector<128x512xf32> to vector<128x512xbf16>
    %c0_6 = arith.constant 0 : index
    %c0_7 = arith.constant 0 : index
    %9 = vector.load %arg4[%c0_6, %c0_7] : memref<2x512xbf16, #tpu.memory_space<vmem>>, vector<2x512xbf16>
    %cst_8 = arith.constant dense<0.000000e+00> : vector<2x128xf32>
    %10 = tpu.matmul %9, %8, %cst_8 {dimension_numbers = #tpu.dot_dimension_numbers<[1], [1], [0], [0], [0, 0, 1, 0], [], []>} : vector<2x512xbf16>, vector<128x512xbf16>, vector<2x128xf32> -> vector<2x128xf32>
    %c0_9 = arith.constant 0 : index
    %c0_10 = arith.constant 0 : index
    %11 = vector.load %arg5[%c0_9, %c0_10] : memref<2x1xf32, #tpu.memory_space<vmem>>, vector<2x1xf32>
    %12 = vector.broadcast %11 : vector<2x1xf32> to vector<2x128xf32>
    %13 = arith.addf %10, %12 : vector<2x128xf32>
    %c0_11 = arith.constant 0 : index
    %c0_12 = arith.constant 0 : index
    %14 = vector.load %arg6[%c0_11, %c0_12] : memref<2x128xf32, #tpu.memory_space<vmem>>, vector<2x128xf32>
    tpu.vector_store %arg6[%c0_11, %c0_12], %13 {strides = array<i32>} : memref<2x128xf32, #tpu.memory_space<vmem>>, vector<2x128xf32>,
    return
  }
  func.func @transform_0(%arg0: i32) -> (i32, i32) {
    %c0_i32 = arith.constant 0 : i32
    %c0_i32_0 = arith.constant 0 : i32
    return %arg0, %c0_i32 : i32, i32
  }
  func.func @transform_1(%arg0: i32) -> (i32, i32) {
    %c0_i32 = arith.constant 0 : i32
    %c0_i32_0 = arith.constant 0 : i32
    %c0_i32_1 = arith.constant 0 : i32
    return %c0_i32, %c0_i32_0 : i32, i32
  }
  func.func @transform_2(%arg0: i32) -> (i32, i32) {
    %c0_i32 = arith.constant 0 : i32
    %c0_i32_0 = arith.constant 0 : i32
    %c0_i32_1 = arith.constant 0 : i32
    return %c0_i32, %c0_i32_0 : i32, i32
  }
  func.func @transform_3(%arg0: i32) -> (i32, i32) {
    %c0_i32 = arith.constant 0 : i32
    %c0_i32_0 = arith.constant 0 : i32
    %c0_i32_1 = arith.constant 0 : i32
    return %c0_i32, %c0_i32_0 : i32, i32
  }
  func.func @transform_4(%arg0: i32) -> (i32, i32) {
    %c0_i32 = arith.constant 0 : i32
    %c0_i32_0 = arith.constant 0 : i32
    %c0_i32_1 = arith.constant 0 : i32
    return %c0_i32, %c0_i32_0 : i32, i32
  }
  func.func @transform_5(%arg0: i32) -> (i32, i32) {
    %c0_i32 = arith.constant 0 : i32
    %c0_i32_0 = arith.constant 0 : i32
    return %c0_i32, %arg0 : i32, i32
  }
}

</mosaic_0001>

<llo_original>
// kernel: output_layer_forward.1
$region0: #{output_layer_forward.1}
  #allocation0 [shape = 'u32[]', space=smem, size = 0x4, offset = 0x4, fixed_abs, tag = 'smem constant byte address 0x4 - core index']
  #allocation1 [shape = 'u32[144,128]{1,0:T(1,128)}', space=vmem, size = 0x12000, scoped, tag = 'internal scratch']
  %s0 = inlined_call_operand.vmem [shape: bf16[256,32], index: 0, kind: input, shape index: {}]
  %s1 = inlined_call_operand.vmem [shape: bf16[32,512], index: 1, kind: input, shape index: {}]
  %s2 = inlined_call_operand.vmem [shape: f32[1,512], index: 2, kind: input, shape index: {}]
  %s3 = inlined_call_operand.vmem [shape: bf16[2,512], index: 3, kind: input, shape index: {}]
  %s4 = inlined_call_operand.vmem [shape: f32[2,1], index: 4, kind: input, shape index: {}]
  %s5 = inlined_call_operand.vmem [shape: f32[2,256], index: 5, kind: output, shape index: {}]
  %s6 = sld [smem:[#allocation0]]
  $region53: #{output_layer_forward.1} parent=0
    _
  %s8 = ssub.s32 1, %s6
  %s9 = scalar_select 0, %s8, %s6
  loop: start=0, step=1, limit=4
  $region2: #{output_layer_forward.1} parent=0 // loop_pre_header
    _
  $region3: #{output_layer_forward.1} parent=0 // loop_header
    %s11 = sphi 0, %s15
    %p12 = scmp.ge.s32.totalorder %s11, 4
    %s21 = sphi 0, %s23
    %s24 = sphi 0, %s21
    %s25 = sphi 0, %s24
    %s41 = sphi 0, %s25
    %s45 = sphi 0, %s45
    %s47 = sphi 0, %s45
    %s48 = sphi 0, %s47
    %s62 = sphi 0, %s48
    %s66 = sphi 0, %s66
    %s68 = sphi 0, %s66
    %s69 = sphi 0, %s68
    %s83 = sphi 0, %s69
    %s87 = sphi 0, %s87
    %s89 = sphi 0, %s87
    %s90 = sphi 0, %s89
    %s104 = sphi 0, %s90
    %s108 = sphi 0, %s108
    %s110 = sphi 0, %s108
    %s111 = sphi 0, %s110
    %s125 = sphi 0, %s111
    %s131 = sphi 0, %s133
    %s134 = sphi 0, %s131
    %s135 = sphi 0, %s134
    %s151 = sphi 0, %s135
  $region4: #{output_layer_forward.1} parent=0 // loop_header_branch
    %14 = sbr.rel (%p12) target = $region8
  $region5: #{output_layer_forward.1} parent=0 // loop_body
    %s16 = ssub.s32 %s11, 1
    %s17 = ssub.s32 %s11, 2
    %s18 = sadd.s32 %s11, 1
    %s19 = ssub.s32 %s11, %s18
    %p20 = scmp.eq.s32.totalorder %s19, 0
    %s22 = sadd.s32 %s21, 1
    %s23 = scalar_select %p20, %s21, %s22
    %p26 = pneg %p20
    %p27 = scmp.eq.s32.totalorder %s11, 1
    %p28 = por %p26, %p27
    %p29 = scmp.ne.s32.totalorder %s21, %s24
    %p30 = scmp.eq.s32.totalorder %s11, 0
    %p31 = por %p29, %p30
    %p32 = scmp.ne.s32.totalorder %s21, %s24
    %p33 = scmp.eq.s32.totalorder %s16, 1
    %p34 = por %p32, %p33
    %p35 = scmp.ne.s32.totalorder %s24, %s25
    %p36 = scmp.eq.s32.totalorder %s16, 0
    %p37 = por %p35, %p36
    %p38 = scmp.ne.s32.totalorder %s24, %s25
    %p39 = scmp.eq.s32.totalorder %s17, 1
    %p40 = por %p38, %p39
    %p42 = scmp.ne.s32.totalorder %s25, %s41
    %p43 = scmp.eq.s32.totalorder %s17, 0
    %p44 = por %p42, %p43
    %s46 = sadd.s32 %s45, 1
    %p49 = scmp.eq.s32.totalorder %s11, 1
    %p50 = scmp.ne.s32.totalorder %s45, %s47
    %p51 = scmp.eq.s32.totalorder %s11, 0
    %p52 = por %p50, %p51
    %p53 = scmp.ne.s32.totalorder %s45, %s47
    %p54 = scmp.eq.s32.totalorder %s16, 1
    %p55 = por %p53, %p54
    %p56 = scmp.ne.s32.totalorder %s47, %s48
    %p57 = scmp.eq.s32.totalorder %s16, 0
    %p58 = por %p56, %p57
    %p59 = scmp.ne.s32.totalorder %s47, %s48
    %p60 = scmp.eq.s32.totalorder %s17, 1
    %p61 = por %p59, %p60
    %p63 = scmp.ne.s32.totalorder %s48, %s62
    %p64 = scmp.eq.s32.totalorder %s17, 0
    %p65 = por %p63, %p64
    %s67 = sadd.s32 %s66, 1
    %p70 = scmp.eq.s32.totalorder %s11, 1
    %p71 = scmp.ne.s32.totalorder %s66, %s68
    %p72 = scmp.eq.s32.totalorder %s11, 0
    %p73 = por %p71, %p72
    %p74 = scmp.ne.s32.totalorder %s66, %s68
    %p75 = scmp.eq.s32.totalorder %s16, 1
    %p76 = por %p74, %p75
    %p77 = scmp.ne.s32.totalorder %s68, %s69
    %p78 = scmp.eq.s32.totalorder %s16, 0
    %p79 = por %p77, %p78
    %p80 = scmp.ne.s32.totalorder %s68, %s69
    %p81 = scmp.eq.s32.totalorder %s17, 1
    %p82 = por %p80, %p81
    %p84 = scmp.ne.s32.totalorder %s69, %s83
    %p85 = scmp.eq.s32.totalorder %s17, 0
    %p86 = por %p84, %p85
    %s88 = sadd.s32 %s87, 1
    %p91 = scmp.eq.s32.totalorder %s11, 1
    %p92 = scmp.ne.s32.totalorder %s87, %s89
    %p93 = scmp.eq.s32.totalorder %s11, 0
    %p94 = por %p92, %p93
    %p95 = scmp.ne.s32.totalorder %s87, %s89
    %p96 = scmp.eq.s32.totalorder %s16, 1
    %p97 = por %p95, %p96
    %p98 = scmp.ne.s32.totalorder %s89, %s90
    %p99 = scmp.eq.s32.totalorder %s16, 0
    %p100 = por %p98, %p99
    %p101 = scmp.ne.s32.totalorder %s89, %s90
    %p102 = scmp.eq.s32.totalorder %s17, 1
    %p103 = por %p101, %p102
    %p105 = scmp.ne.s32.totalorder %s90, %s104
    %p106 = scmp.eq.s32.totalorder %s17, 0
    %p107 = por %p105, %p106
    %s109 = sadd.s32 %s108, 1
    %p112 = scmp.eq.s32.totalorder %s11, 1
    %p113 = scmp.ne.s32.totalorder %s108, %s110
    %p114 = scmp.eq.s32.totalorder %s11, 0
    %p115 = por %p113, %p114
    %p116 = scmp.ne.s32.totalorder %s108, %s110
    %p117 = scmp.eq.s32.totalorder %s16, 1
    %p118 = por %p116, %p117
    %p119 = scmp.ne.s32.totalorder %s110, %s111
    %p120 = scmp.eq.s32.totalorder %s16, 0
    %p121 = por %p119, %p120
    %p122 = scmp.ne.s32.totalorder %s110, %s111
    %p123 = scmp.eq.s32.totalorder %s17, 1
    %p124 = por %p122, %p123
    %p126 = scmp.ne.s32.totalorder %s111, %s125
    %p127 = scmp.eq.s32.totalorder %s17, 0
    %p128 = por %p126, %p127
    %s129 = ssub.s32 %s11, %s18
    %p130 = scmp.eq.s32.totalorder %s129, 0
    %s132 = sadd.s32 %s131, 1
    %s133 = scalar_select %p130, %s131, %s132
    %p136 = pneg %p130
    %p137 = scmp.eq.s32.totalorder %s11, 1
    %p138 = por %p136, %p137
    %p139 = scmp.ne.s32.totalorder %s131, %s134
    %p140 = scmp.eq.s32.totalorder %s11, 0
    %p141 = por %p139, %p140
    %p142 = scmp.ne.s32.totalorder %s131, %s134
    %p143 = scmp.eq.s32.totalorder %s16, 1
    %p144 = por %p142, %p143
    %p145 = scmp.ne.s32.totalorder %s134, %s135
    %p146 = scmp.eq.s32.totalorder %s16, 0
    %p147 = por %p145, %p146
    %p148 = scmp.ne.s32.totalorder %s134, %s135
    %p149 = scmp.eq.s32.totalorder %s17, 1
    %p150 = por %p148, %p149
    %p152 = scmp.ne.s32.totalorder %s135, %s151
    %p153 = scmp.eq.s32.totalorder %s17, 0
    %p154 = por %p152, %p153
    %p155 = scmp.le.s32.totalorder 1, %s11
    %p156 = scmp.lt.s32.totalorder %s11, 3
    %p157 = pnand %p155, %p156
    %p158 = pneg %p157
    // Predicated region
    $region9: #{output_layer_forward.1} parent=5 // pred_check
      _
    $region10: #{output_layer_forward.1} parent=5 // pred_check_branch
      %160 = sbr.rel (%p157) target = $region12
    $region11: #{output_layer_forward.1} parent=5 // pred_region
      %s161 = ssub.s32 %s11, 1
      // Predicated region
      $region13: #{output_layer_forward.1} parent=11 // pred_check
        %p162 = pneg %p58
      $region14: #{output_layer_forward.1} parent=11 // pred_check_branch
        %164 = sbr.rel (%p162) target = $region16
      $region15: #{output_layer_forward.1} parent=11 // pred_region
        _
      $region16: #{output_layer_forward.1} parent=11 // pred_fallthru
        _
      // Predicated region
      $region17: #{output_layer_forward.1} parent=11 // pred_check
        %p165 = pneg %p79
      $region18: #{output_layer_forward.1} parent=11 // pred_check_branch
        %167 = sbr.rel (%p165) target = $region20
      $region19: #{output_layer_forward.1} parent=11 // pred_region
        _
      $region20: #{output_layer_forward.1} parent=11 // pred_fallthru
        _
      // Predicated region
      $region21: #{output_layer_forward.1} parent=11 // pred_check
        %p168 = pneg %p100
      $region22: #{output_layer_forward.1} parent=11 // pred_check_branch
        %170 = sbr.rel (%p168) target = $region24
      $region23: #{output_layer_forward.1} parent=11 // pred_region
        _
      $region24: #{output_layer_forward.1} parent=11 // pred_fallthru
        _
      // Predicated region
      $region25: #{output_layer_forward.1} parent=11 // pred_check
        %p171 = pneg %p121
      $region26: #{output_layer_forward.1} parent=11 // pred_check_branch
        %173 = sbr.rel (%p171) target = $region28
      $region27: #{output_layer_forward.1} parent=11 // pred_region
        _
      $region28: #{output_layer_forward.1} parent=11 // pred_fallthru
        _
    $region12: #{output_layer_forward.1} parent=5 // pred_fallthru
      _
    %p174 = scmp.lt.s32.totalorder %s11, 2
    // Predicated region
    $region29: #{output_layer_forward.1} parent=5 // pred_check
      %p175 = pneg %p174
    $region30: #{output_layer_forward.1} parent=5 // pred_check_branch
      %177 = sbr.rel (%p175) target = $region32
    $region31: #{output_layer_forward.1} parent=5 // pred_region
      // Predicated region
      $region33: #{output_layer_forward.1} parent=31 // pred_check
        %p178 = pneg %p31
      $region34: #{output_layer_forward.1} parent=31 // pred_check_branch
        %180 = sbr.rel (%p178) target = $region36
      $region35: #{output_layer_forward.1} parent=31 // pred_region
        %s181 = smul.u32 16, %s11
        %p182 = scmp.lt.s32.totalorder %s181, 31
        %s183 = scalar_select %p182, %s181, 31
        %s184 = smul.addr %s183, 4
        %s185 = scalar_lea.vmem %s0, %s184
        %s186 = smul.u32 16, %s11
      $region36: #{output_layer_forward.1} parent=31 // pred_fallthru
        _
    $region32: #{output_layer_forward.1} parent=5 // pred_fallthru
      _
    %p187 = scmp.le.s32.totalorder 1, %s11
    %p188 = scmp.lt.s32.totalorder %s11, 3
    %p189 = pnand %p187, %p188
    %p190 = pneg %p189
    // Predicated region
    $region37: #{output_layer_forward.1} parent=5 // pred_check
      _
    $region38: #{output_layer_forward.1} parent=5 // pred_check_branch
      %192 = sbr.rel (%p189) target = $region40
    $region39: #{output_layer_forward.1} parent=5 // pred_region
      %s193 = ssub.s32 %s11, 1
      %s194 = smul.u32 16, %s16
      %p195 = scmp.lt.s32.totalorder %s194, 31
      %s196 = scalar_select %p195, %s194, 31
      %s197 = smul.addr %s196, 4
      %s198 = scalar_lea.vmem %s0, %s197
      %p199 = pneg %p37
      %p200 = pneg %p34
      %p201 = pneg %p58
      %p202 = pneg %p55
      %p203 = pneg %p79
      %p204 = pneg %p76
      %p205 = pneg %p100
      %p206 = pneg %p97
      %p207 = pneg %p121
      %p208 = pneg %p118
      %p209 = pneg %p147
      %p210 = pneg %p144
      %p211 = scmp.lt.s32.totalorder %s16, 1
      %s212 = scalar_select %p211, %s16, 1
      %s213 = smul.addr %s212, 2
      %s214 = scalar_lea.vmem %s5, %s213
      %s215 = smul.u32 16, %s16
      %p216 = scmp.lt.s32.totalorder %s215, 31
      %s217 = scalar_select %p216, %s215, 31
      %s218 = smul.addr %s217, 4
      %s219 = scalar_lea.vmem %s0, %s218
      %s220 = smul.u32 16, %s16
      %p221 = scmp.lt.s32.totalorder %s16, 1
      %s222 = scalar_select %p221, %s16, 1
      %s223 = smul.addr %s222, 2
      %s224 = scalar_lea.vmem %s5, %s223
      %v226 = vld [vmem:[%s219] sm:$0xf]
      %v227 = vld [vmem:[%s219 + $0x4] sm:$0xf]
      %v228 = vld [vmem:[%s219 + $0x8] sm:$0xf]
      %v229 = vld [vmem:[%s219 + $0xc] sm:$0xf]
      %v230 = vld [vmem:[%s219 + $0x10] sm:$0xf]
      %v231 = vld [vmem:[%s219 + $0x14] sm:$0xf]
      %v232 = vld [vmem:[%s219 + $0x18] sm:$0xf]
      %v233 = vld [vmem:[%s219 + $0x1c] sm:$0xf]
      %v234 = vld [vmem:[%s219 + $0x20] sm:$0xf]
      %v235 = vld [vmem:[%s219 + $0x24] sm:$0xf]
      %v236 = vld [vmem:[%s219 + $0x28] sm:$0xf]
      %v237 = vld [vmem:[%s219 + $0x2c] sm:$0xf]
      %v238 = vld [vmem:[%s219 + $0x30] sm:$0xf]
      %v239 = vld [vmem:[%s219 + $0x34] sm:$0xf]
      %v240 = vld [vmem:[%s219 + $0x38] sm:$0xf]
      %v241 = vld [vmem:[%s219 + $0x3c] sm:$0xf]
      %v242 = vld [vmem:[%s1] sm:$0xff]
      %v243 = vld [vmem:[%s1 + $0x8] sm:$0xff]
      %v244 = vld [vmem:[%s1 + $0x10] sm:$0xff]
      %v245 = vld [vmem:[%s1 + $0x18] sm:$0xff]
      %v246 = vld [vmem:[%s1 + $0x20] sm:$0xff]
      %v247 = vld [vmem:[%s1 + $0x28] sm:$0xff]
      %v248 = vld [vmem:[%s1 + $0x30] sm:$0xff]
      %v249 = vld [vmem:[%s1 + $0x38] sm:$0xff]
      %v250 = vld [vmem:[%s2] sm:$0xf]
      %v252 = vlaneseq
      %v253 = vshrl.u32 %v252, 7
      %v254 = vsub.s32 0, %v253
      %v255 = vrot.slane %v250, %v254
      %v256 = vlaneseq
      %v257 = vshrl.u32 %v256, 7
      %v258 = vsub.s32 1, %v257
      %v259 = vrot.slane %v250, %v258
      %v260 = vlaneseq
      %v261 = vshrl.u32 %v260, 7
      %v262 = vsub.s32 2, %v261
      %v263 = vrot.slane %v250, %v262
      %v264 = vlaneseq
      %v265 = vshrl.u32 %v264, 7
      %v266 = vsub.s32 3, %v265
      %v267 = vrot.slane %v250, %v266
      %v288 = vunpack.c.l.b16 %v226
      %v289 = vunpack.c.l.b16 %v227
      %v290 = vunpack.c.l.b16 %v228
      %v291 = vunpack.c.l.b16 %v229
      %v292 = vunpack.c.l.b16 %v230
      %v293 = vunpack.c.l.b16 %v231
      %v294 = vunpack.c.l.b16 %v232
      %v295 = vunpack.c.l.b16 %v233
      %v296 = vunpack.c.l.b16 %v234
      %v297 = vunpack.c.l.b16 %v235
      %v298 = vunpack.c.l.b16 %v236
      %v299 = vunpack.c.l.b16 %v237
      %v300 = vunpack.c.l.b16 %v238
      %v301 = vunpack.c.l.b16 %v239
      %v302 = vunpack.c.l.b16 %v240
      %v303 = vunpack.c.l.b16 %v241
      %v304 = vpack.c.b16 %v289, %v288
      %v305 = vpack.c.b16 %v291, %v290
      %v306 = vpack.c.b16 %v293, %v292
      %v307 = vpack.c.b16 %v295, %v294
      %v308 = vpack.c.b16 %v297, %v296
      %v309 = vpack.c.b16 %v299, %v298
      %v310 = vpack.c.b16 %v301, %v300
      %v311 = vpack.c.b16 %v303, %v302
      %v320 = vunpack.c.l.b16 %v242
      %v321 = vunpack.c.h.b16 %v242
      %v322 = vunpack.c.l.b16 %v243
      %v323 = vunpack.c.h.b16 %v243
      %v324 = vunpack.c.l.b16 %v244
      %v325 = vunpack.c.h.b16 %v244
      %v326 = vunpack.c.l.b16 %v245
      %v327 = vunpack.c.h.b16 %v245
      %v328 = vunpack.c.l.b16 %v246
      %v329 = vunpack.c.h.b16 %v246
      %v330 = vunpack.c.l.b16 %v247
      %v331 = vunpack.c.h.b16 %v247
      %v332 = vunpack.c.l.b16 %v248
      %v333 = vunpack.c.h.b16 %v248
      %v334 = vunpack.c.l.b16 %v249
      %v335 = vunpack.c.h.b16 %v249
      %v336 = vpack.c.b16 %v324, %v320
      %v337 = vpack.c.b16 %v325, %v321
      %v338 = vpack.c.b16 %v326, %v322
      %v339 = vpack.c.b16 %v327, %v323
      %v340 = vpack.c.b16 %v332, %v328
      %v341 = vpack.c.b16 %v333, %v329
      %v342 = vpack.c.b16 %v334, %v330
      %v343 = vpack.c.b16 %v335, %v331
      %vm352 = vcmask 261120
      %v354 = vsel %vm352, %v304, 0
      %v357 = vsel %vm352, %v305, 0
      %v360 = vsel %vm352, %v306, 0
      %v363 = vsel %vm352, %v307, 0
      %v366 = vsel %vm352, %v308, 0
      %v369 = vsel %vm352, %v309, 0
      %v372 = vsel %vm352, %v310, 0
      %v375 = vsel %vm352, %v311, 0
      %377 = vmatprep.subr.bf16.mxu0 %v337
      %378 = vmatpush1.bf16.msra.mxu0 %v336
      %379 = vmatprep.subr.bf16.mxu0 %v341
      %380 = vmatpush1.bf16.msra.mxu0 %v340
      %381 = vmatprep.subr.bf16.mxu0 0
      %382 = vmatpush1.bf16.msra.mxu0 0
      %383 = vmatprep.subr.bf16.mxu0 0
      %384 = vmatpush1.bf16.msra.mxu0 0
      %385 = vmatprep.subr.bf16.mxu0 0
      %386 = vmatpush1.bf16.msra.mxu0 0
      %387 = vmatprep.subr.bf16.mxu0 0
      %388 = vmatpush1.bf16.msra.mxu0 0
      %389 = vmatprep.subr.bf16.mxu0 0
      %390 = vmatpush1.bf16.msra.mxu0 0
      %391 = vmatprep.subr.bf16.mxu0 0
      %392 = vmatpush1.bf16.msra.mxu0 0
      %393 = vmatprep.subr.bf16.mxu0 0
      %394 = vmatpush1.bf16.msra.mxu0 0
      %395 = vmatprep.subr.bf16.mxu0 0
      %396 = vmatpush1.bf16.msra.mxu0 0
      %397 = vmatprep.subr.bf16.mxu0 0
      %398 = vmatpush1.bf16.msra.mxu0 0
      %399 = vmatprep.subr.bf16.mxu0 0
      %400 = vmatpush1.bf16.msra.mxu0 0
      %401 = vmatprep.subr.bf16.mxu0 0
      %402 = vmatpush1.bf16.msra.mxu0 0
      %403 = vmatprep.subr.bf16.mxu0 0
      %404 = vmatpush1.bf16.msra.mxu0 0
      %405 = vmatprep.subr.bf16.mxu0 0
      %406 = vmatpush1.bf16.msra.mxu0 0
      %407 = vmatprep.subr.bf16.mxu0 0
      %408 = vmatpush1.bf16.msra.mxu0 0
      %409 = vmatprep.mubr.bf16.mxu0 0
      %410 = vmatmul.mubr.bf16.gmra.mrb[0].mxu0 %v354
      %v411 = vpop.f32.mrb[0].mxu0
      %v412 = vadd.f32 %v255, %v411
      %v413 = vpop.f32.mrb[0].mxu0
      %v414 = vadd.f32 %v259, %v413
      %v415 = vpop.f32.mrb[0].mxu0
      %v416 = vadd.f32 %v255, %v415
      %v417 = vpop.f32.mrb[0].mxu0
      %v418 = vadd.f32 %v259, %v417
      %419 = vmatprep.mubr.bf16.mxu0 0
      %420 = vmatmul.mubr.bf16.gmra.mrb[0].mxu0 %v357
      %v421 = vpop.f32.mrb[0].mxu0
      %v422 = vadd.f32 %v255, %v421
      %v423 = vpop.f32.mrb[0].mxu0
      %v424 = vadd.f32 %v259, %v423
      %v425 = vpop.f32.mrb[0].mxu0
      %v426 = vadd.f32 %v255, %v425
      %v427 = vpop.f32.mrb[0].mxu0
      %v428 = vadd.f32 %v259, %v427
      %429 = vmatprep.mubr.bf16.mxu0 0
      %430 = vmatmul.mubr.bf16.gmra.mrb[0].mxu0 %v360
      %v431 = vpop.f32.mrb[0].mxu0
      %v432 = vadd.f32 %v255, %v431
      %v433 = vpop.f32.mrb[0].mxu0
      %v434 = vadd.f32 %v259, %v433
      %v435 = vpop.f32.mrb[0].mxu0
      %v436 = vadd.f32 %v255, %v435
      %v437 = vpop.f32.mrb[0].mxu0
      %v438 = vadd.f32 %v259, %v437
      %439 = vmatprep.mubr.bf16.mxu0 0
      %440 = vmatmul.mubr.bf16.gmra.mrb[0].mxu0 %v363
      %v441 = vpop.f32.mrb[0].mxu0
      %v442 = vadd.f32 %v255, %v441
      %v443 = vpop.f32.mrb[0].mxu0
      %v444 = vadd.f32 %v259, %v443
      %v445 = vpop.f32.mrb[0].mxu0
      %v446 = vadd.f32 %v255, %v445
      %v447 = vpop.f32.mrb[0].mxu0
      %v448 = vadd.f32 %v259, %v447
      %449 = vmatprep.mubr.bf16.mxu0 0
      %450 = vmatmul.mubr.bf16.gmra.mrb[0].mxu0 %v366
      %v451 = vpop.f32.mrb[0].mxu0
      %v452 = vadd.f32 %v255, %v451
      %v453 = vpop.f32.mrb[0].mxu0
      %v454 = vadd.f32 %v259, %v453
      %v455 = vpop.f32.mrb[0].mxu0
      %v456 = vadd.f32 %v255, %v455
      %v457 = vpop.f32.mrb[0].mxu0
      %v458 = vadd.f32 %v259, %v457
      %459 = vmatprep.mubr.bf16.mxu0 0
      %460 = vmatmul.mubr.bf16.gmra.mrb[0].mxu0 %v369
      %v461 = vpop.f32.mrb[0].mxu0
      %v462 = vadd.f32 %v255, %v461
      %v463 = vpop.f32.mrb[0].mxu0
      %v464 = vadd.f32 %v259, %v463
      %v465 = vpop.f32.mrb[0].mxu0
      %v466 = vadd.f32 %v255, %v465
      %v467 = vpop.f32.mrb[0].mxu0
      %v468 = vadd.f32 %v259, %v467
      %469 = vmatprep.mubr.bf16.mxu0 0
      %470 = vmatmul.mubr.bf16.gmra.mrb[0].mxu0 %v372
      %v471 = vpop.f32.mrb[0].mxu0
      %v472 = vadd.f32 %v255, %v471
      %v473 = vpop.f32.mrb[0].mxu0
      %v474 = vadd.f32 %v259, %v473
      %v475 = vpop.f32.mrb[0].mxu0
      %v476 = vadd.f32 %v255, %v475
      %v477 = vpop.f32.mrb[0].mxu0
      %v478 = vadd.f32 %v259, %v477
      %479 = vmatprep.mubr.bf16.mxu0 0
      %480 = vmatmul.mubr.bf16.gmra.mrb[0].mxu0 %v375
      %v481 = vpop.f32.mrb[0].mxu0
      %v482 = vadd.f32 %v255, %v481
      %v483 = vpop.f32.mrb[0].mxu0
      %v484 = vadd.f32 %v259, %v483
      %v485 = vpop.f32.mrb[0].mxu0
      %v486 = vadd.f32 %v255, %v485
      %v487 = vpop.f32.mrb[0].mxu0
      %v488 = vadd.f32 %v259, %v487
      %489 = vdwg.mxu0
      %490 = vmatprep.subr.bf16.mxu0 %v339
      %491 = vmatpush1.bf16.msra.mxu0 %v338
      %492 = vmatprep.subr.bf16.mxu0 %v343
      %493 = vmatpush1.bf16.msra.mxu0 %v342
      %494 = vmatprep.subr.bf16.mxu0 0
      %495 = vmatpush1.bf16.msra.mxu0 0
      %496 = vmatprep.subr.bf16.mxu0 0
      %497 = vmatpush1.bf16.msra.mxu0 0
      %498 = vmatprep.subr.bf16.mxu0 0
      %499 = vmatpush1.bf16.msra.mxu0 0
      %500 = vmatprep.subr.bf16.mxu0 0
      %501 = vmatpush1.bf16.msra.mxu0 0
      %502 = vmatprep.subr.bf16.mxu0 0
      %503 = vmatpush1.bf16.msra.mxu0 0
      %504 = vmatprep.subr.bf16.mxu0 0
      %505 = vmatpush1.bf16.msra.mxu0 0
      %506 = vmatprep.subr.bf16.mxu0 0
      %507 = vmatpush1.bf16.msra.mxu0 0
      %508 = vmatprep.subr.bf16.mxu0 0
      %509 = vmatpush1.bf16.msra.mxu0 0
      %510 = vmatprep.subr.bf16.mxu0 0
      %511 = vmatpush1.bf16.msra.mxu0 0
      %512 = vmatprep.subr.bf16.mxu0 0
      %513 = vmatpush1.bf16.msra.mxu0 0
      %514 = vmatprep.subr.bf16.mxu0 0
      %515 = vmatpush1.bf16.msra.mxu0 0
      %516 = vmatprep.subr.bf16.mxu0 0
      %517 = vmatpush1.bf16.msra.mxu0 0
      %518 = vmatprep.subr.bf16.mxu0 0
      %519 = vmatpush1.bf16.msra.mxu0 0
      %520 = vmatprep.subr.bf16.mxu0 0
      %521 = vmatpush1.bf16.msra.mxu0 0
      %522 = vmatprep.mubr.bf16.mxu0 0
      %523 = vmatmul.mubr.bf16.gmra.mrb[0].mxu0 %v354
      %v524 = vpop.f32.mrb[0].mxu0
      %v525 = vadd.f32 %v263, %v524
      %v526 = vpop.f32.mrb[0].mxu0
      %v527 = vadd.f32 %v267, %v526
      %v528 = vpop.f32.mrb[0].mxu0
      %v529 = vadd.f32 %v263, %v528
      %v530 = vpop.f32.mrb[0].mxu0
      %v531 = vadd.f32 %v267, %v530
      %532 = vmatprep.mubr.bf16.mxu0 0
      %533 = vmatmul.mubr.bf16.gmra.mrb[0].mxu0 %v357
      %v534 = vpop.f32.mrb[0].mxu0
      %v535 = vadd.f32 %v263, %v534
      %v536 = vpop.f32.mrb[0].mxu0
      %v537 = vadd.f32 %v267, %v536
      %v538 = vpop.f32.mrb[0].mxu0
      %v539 = vadd.f32 %v263, %v538
      %v540 = vpop.f32.mrb[0].mxu0
      %v541 = vadd.f32 %v267, %v540
      %542 = vmatprep.mubr.bf16.mxu0 0
      %543 = vmatmul.mubr.bf16.gmra.mrb[0].mxu0 %v360
      %v544 = vpop.f32.mrb[0].mxu0
      %v545 = vadd.f32 %v263, %v544
      %v546 = vpop.f32.mrb[0].mxu0
      %v547 = vadd.f32 %v267, %v546
      %v548 = vpop.f32.mrb[0].mxu0
      %v549 = vadd.f32 %v263, %v548
      %v550 = vpop.f32.mrb[0].mxu0
      %v551 = vadd.f32 %v267, %v550
      %552 = vmatprep.mubr.bf16.mxu0 0
      %553 = vmatmul.mubr.bf16.gmra.mrb[0].mxu0 %v363
      %v554 = vpop.f32.mrb[0].mxu0
      %v555 = vadd.f32 %v263, %v554
      %v556 = vpop.f32.mrb[0].mxu0
      %v557 = vadd.f32 %v267, %v556
      %v558 = vpop.f32.mrb[0].mxu0
      %v559 = vadd.f32 %v263, %v558
      %v560 = vpop.f32.mrb[0].mxu0
      %v561 = vadd.f32 %v267, %v560
      %562 = vmatprep.mubr.bf16.mxu0 0
      %563 = vmatmul.mubr.bf16.gmra.mrb[0].mxu0 %v366
      %v564 = vpop.f32.mrb[0].mxu0
      %v565 = vadd.f32 %v263, %v564
      %v566 = vpop.f32.mrb[0].mxu0
      %v567 = vadd.f32 %v267, %v566
      %v568 = vpop.f32.mrb[0].mxu0
      %v569 = vadd.f32 %v263, %v568
      %v570 = vpop.f32.mrb[0].mxu0
      %v571 = vadd.f32 %v267, %v570
      %572 = vmatprep.mubr.bf16.mxu0 0
      %573 = vmatmul.mubr.bf16.gmra.mrb[0].mxu0 %v369
      %v574 = vpop.f32.mrb[0].mxu0
      %v575 = vadd.f32 %v263, %v574
      %v576 = vpop.f32.mrb[0].mxu0
      %v577 = vadd.f32 %v267, %v576
      %v578 = vpop.f32.mrb[0].mxu0
      %v579 = vadd.f32 %v263, %v578
      %v580 = vpop.f32.mrb[0].mxu0
      %v581 = vadd.f32 %v267, %v580
      %582 = vmatprep.mubr.bf16.mxu0 0
      %583 = vmatmul.mubr.bf16.gmra.mrb[0].mxu0 %v372
      %v584 = vpop.f32.mrb[0].mxu0
      %v585 = vadd.f32 %v263, %v584
      %v586 = vpop.f32.mrb[0].mxu0
      %v587 = vadd.f32 %v267, %v586
      %v588 = vpop.f32.mrb[0].mxu0
      %v589 = vadd.f32 %v263, %v588
      %v590 = vpop.f32.mrb[0].mxu0
      %v591 = vadd.f32 %v267, %v590
      %592 = vmatprep.mubr.bf16.mxu0 0
      %593 = vmatmul.mubr.bf16.gmra.mrb[0].mxu0 %v375
      %v594 = vpop.f32.mrb[0].mxu0
      %v595 = vadd.f32 %v263, %v594
      %v596 = vpop.f32.mrb[0].mxu0
      %v597 = vadd.f32 %v267, %v596
      %v598 = vpop.f32.mrb[0].mxu0
      %v599 = vadd.f32 %v263, %v598
      %v600 = vpop.f32.mrb[0].mxu0
      %v601 = vadd.f32 %v267, %v600
      %602 = vdwg.mxu0
      %v603 = vmax.f32 %v412, 0.0
      %v604 = vmax.f32 %v414, 0.0
      %v605 = vmax.f32 %v525, 0.0
      %v606 = vmax.f32 %v527, 0.0
      %v607 = vmax.f32 %v416, 0.0
      %v608 = vmax.f32 %v418, 0.0
      %v609 = vmax.f32 %v529, 0.0
      %v610 = vmax.f32 %v531, 0.0
      %v611 = vmax.f32 %v422, 0.0
      %v612 = vmax.f32 %v424, 0.0
      %v613 = vmax.f32 %v535, 0.0
      %v614 = vmax.f32 %v537, 0.0
      %v615 = vmax.f32 %v426, 0.0
      %v616 = vmax.f32 %v428, 0.0
      %v617 = vmax.f32 %v539, 0.0
      %v618 = vmax.f32 %v541, 0.0
      %v619 = vmax.f32 %v432, 0.0
      %v620 = vmax.f32 %v434, 0.0
      %v621 = vmax.f32 %v545, 0.0
      %v622 = vmax.f32 %v547, 0.0
      %v623 = vmax.f32 %v436, 0.0
      %v624 = vmax.f32 %v438, 0.0
      %v625 = vmax.f32 %v549, 0.0
      %v626 = vmax.f32 %v551, 0.0
      %v627 = vmax.f32 %v442, 0.0
      %v628 = vmax.f32 %v444, 0.0
      %v629 = vmax.f32 %v555, 0.0
      %v630 = vmax.f32 %v557, 0.0
      %v631 = vmax.f32 %v446, 0.0
      %v632 = vmax.f32 %v448, 0.0
      %v633 = vmax.f32 %v559, 0.0
      %v634 = vmax.f32 %v561, 0.0
      %v635 = vmax.f32 %v452, 0.0
      %v636 = vmax.f32 %v454, 0.0
      %v637 = vmax.f32 %v565, 0.0
      %v638 = vmax.f32 %v567, 0.0
      %v639 = vmax.f32 %v456, 0.0
      %v640 = vmax.f32 %v458, 0.0
      %v641 = vmax.f32 %v569, 0.0
      %v642 = vmax.f32 %v571, 0.0
      %v643 = vmax.f32 %v462, 0.0
      %v644 = vmax.f32 %v464, 0.0
      %v645 = vmax.f32 %v575, 0.0
      %v646 = vmax.f32 %v577, 0.0
      %v647 = vmax.f32 %v466, 0.0
      %v648 = vmax.f32 %v468, 0.0
      %v649 = vmax.f32 %v579, 0.0
      %v650 = vmax.f32 %v581, 0.0
      %v651 = vmax.f32 %v472, 0.0
      %v652 = vmax.f32 %v474, 0.0
      %v653 = vmax.f32 %v585, 0.0
      %v654 = vmax.f32 %v587, 0.0
      %v655 = vmax.f32 %v476, 0.0
      %v656 = vmax.f32 %v478, 0.0
      %v657 = vmax.f32 %v589, 0.0
      %v658 = vmax.f32 %v591, 0.0
      %v659 = vmax.f32 %v482, 0.0
      %v660 = vmax.f32 %v484, 0.0
      %v661 = vmax.f32 %v595, 0.0
      %v662 = vmax.f32 %v597, 0.0
      %v663 = vmax.f32 %v486, 0.0
      %v664 = vmax.f32 %v488, 0.0
      %v665 = vmax.f32 %v599, 0.0
      %v666 = vmax.f32 %v601, 0.0
      %v667 = vpack.c.bf16 %v607, %v603
      %v668 = vpack.c.bf16 %v608, %v604
      %v669 = vpack.c.bf16 %v609, %v605
      %v670 = vpack.c.bf16 %v610, %v606
      %v671 = vpack.c.bf16 %v615, %v611
      %v672 = vpack.c.bf16 %v616, %v612
      %v673 = vpack.c.bf16 %v617, %v613
      %v674 = vpack.c.bf16 %v618, %v614
      %v675 = vpack.c.bf16 %v623, %v619
      %v676 = vpack.c.bf16 %v624, %v620
      %v677 = vpack.c.bf16 %v625, %v621
      %v678 = vpack.c.bf16 %v626, %v622
      %v679 = vpack.c.bf16 %v631, %v627
      %v680 = vpack.c.bf16 %v632, %v628
      %v681 = vpack.c.bf16 %v633, %v629
      %v682 = vpack.c.bf16 %v634, %v630
      %v683 = vpack.c.bf16 %v639, %v635
      %v684 = vpack.c.bf16 %v640, %v636
      %v685 = vpack.c.bf16 %v641, %v637
      %v686 = vpack.c.bf16 %v642, %v638
      %v687 = vpack.c.bf16 %v647, %v643
      %v688 = vpack.c.bf16 %v648, %v644
      %v689 = vpack.c.bf16 %v649, %v645
      %v690 = vpack.c.bf16 %v650, %v646
      %v691 = vpack.c.bf16 %v655, %v651
      %v692 = vpack.c.bf16 %v656, %v652
      %v693 = vpack.c.bf16 %v657, %v653
      %v694 = vpack.c.bf16 %v658, %v654
      %v695 = vpack.c.bf16 %v663, %v659
      %v696 = vpack.c.bf16 %v664, %v660
      %v697 = vpack.c.bf16 %v665, %v661
      %v698 = vpack.c.bf16 %v666, %v662
      %v699 = vld [vmem:[%s3] sm:$0xf]
      %v700 = vld [vmem:[%s4] sm:$0x3]
      %702 = vset.pattern.permute.xlu0 0
      %703 = vperm.xlu0 %702, %v700
      %v704 = vpop.permute.xlu0 %703
      %v708 = vunpack.c.l.s4 1966171168
      %v709 = vunpack.c.0.s8 %v708
      %v710 = vlaneseq
      %v711 = vshrl.u32 %v710, 7
      %v712 = vsub.s32 %v709, %v711
      %v713 = vrot.slane %v699, %v712
      %v714 = vcombine.high %v713, %v713
      %v716 = vunpack.c.l.s4 1966171168
      %v717 = vunpack.c.0.s8 %v716
      %v718 = vlaneseq
      %v719 = vshrl.u32 %v718, 7
      %v720 = vsub.s32 %v717, %v719
      %v721 = vrot.slane %v713, %v720
      %v723 = vunpack.c.l.s4 1966171168
      %v724 = vunpack.c.0.s8 %v723
      %v725 = vlaneseq
      %v726 = vshrl.u32 %v725, 7
      %v727 = vsub.s32 %v724, %v726
      %v728 = vrot.slane %v714, %v727
      %v729 = vcombine.high %v721, %v721
      %v730 = vcombine.high %v728, %v728
      %735 = vmatprep.subr.bf16.mxu0 %v668
      %736 = vmatpush1.bf16.xpose.msra.mxu0 %v667
      %737 = vmatprep.subr.bf16.mxu0 %v672
      %738 = vmatpush1.bf16.xpose.msra.mxu0 %v671
      %739 = vmatprep.subr.bf16.mxu0 %v676
      %740 = vmatpush1.bf16.xpose.msra.mxu0 %v675
      %741 = vmatprep.subr.bf16.mxu0 %v680
      %742 = vmatpush1.bf16.xpose.msra.mxu0 %v679
      %743 = vmatprep.subr.bf16.mxu0 %v684
      %744 = vmatpush1.bf16.xpose.msra.mxu0 %v683
      %745 = vmatprep.subr.bf16.mxu0 %v688
      %746 = vmatpush1.bf16.xpose.msra.mxu0 %v687
      %747 = vmatprep.subr.bf16.mxu0 %v692
      %748 = vmatpush1.bf16.xpose.msra.mxu0 %v691
      %749 = vmatprep.subr.bf16.mxu0 %v696
      %750 = vmatpush1.bf16.xpose.msra.mxu0 %v695
      %751 = vmatprep.subr.bf16.mxu0 0
      %752 = vmatpush1.bf16.xpose.msra.mxu0 0
      %753 = vmatprep.subr.bf16.mxu0 0
      %754 = vmatpush1.bf16.xpose.msra.mxu0 0
      %755 = vmatprep.subr.bf16.mxu0 0
      %756 = vmatpush1.bf16.xpose.msra.mxu0 0
      %757 = vmatprep.subr.bf16.mxu0 0
      %758 = vmatpush1.bf16.xpose.msra.mxu0 0
      %759 = vmatprep.subr.bf16.mxu0 0
      %760 = vmatpush1.bf16.xpose.msra.mxu0 0
      %761 = vmatprep.subr.bf16.mxu0 0
      %762 = vmatpush1.bf16.xpose.msra.mxu0 0
      %763 = vmatprep.subr.bf16.mxu0 0
      %764 = vmatpush1.bf16.xpose.msra.mxu0 0
      %765 = vmatprep.subr.bf16.mxu0 0
      %766 = vmatpush1.bf16.xpose.msra.mxu0 0
      %767 = vmatprep.mubr.bf16.mxu0 %v728
      %768 = vmatmul.mubr.bf16.gmra.mrb[0].mxu0 %v721
      %v769 = vpop.f32.mrb[0].mxu0
      %v770 = vadd.f32 %v704, %v769
      %v771 = vpop.f32.mrb[0].mxu0
      %v772 = vpop.f32.mrb[0].mxu0
      %v773 = vpop.f32.mrb[0].mxu0
      %774 = vdwg.mxu0
      %775 = vmatprep.subr.bf16.mxu0 %v670
      %776 = vmatpush1.bf16.xpose.msra.mxu0 %v669
      %777 = vmatprep.subr.bf16.mxu0 %v674
      %778 = vmatpush1.bf16.xpose.msra.mxu0 %v673
      %779 = vmatprep.subr.bf16.mxu0 %v678
      %780 = vmatpush1.bf16.xpose.msra.mxu0 %v677
      %781 = vmatprep.subr.bf16.mxu0 %v682
      %782 = vmatpush1.bf16.xpose.msra.mxu0 %v681
      %783 = vmatprep.subr.bf16.mxu0 %v686
      %784 = vmatpush1.bf16.xpose.msra.mxu0 %v685
      %785 = vmatprep.subr.bf16.mxu0 %v690
      %786 = vmatpush1.bf16.xpose.msra.mxu0 %v689
      %787 = vmatprep.subr.bf16.mxu0 %v694
      %788 = vmatpush1.bf16.xpose.msra.mxu0 %v693
      %789 = vmatprep.subr.bf16.mxu0 %v698
      %790 = vmatpush1.bf16.xpose.msra.mxu0 %v697
      %791 = vmatprep.subr.bf16.mxu0 0
      %792 = vmatpush1.bf16.xpose.msra.mxu0 0
      %793 = vmatprep.subr.bf16.mxu0 0
      %794 = vmatpush1.bf16.xpose.msra.mxu0 0
      %795 = vmatprep.subr.bf16.mxu0 0
      %796 = vmatpush1.bf16.xpose.msra.mxu0 0
      %797 = vmatprep.subr.bf16.mxu0 0
      %798 = vmatpush1.bf16.xpose.msra.mxu0 0
      %799 = vmatprep.subr.bf16.mxu0 0
      %800 = vmatpush1.bf16.xpose.msra.mxu0 0
      %801 = vmatprep.subr.bf16.mxu0 0
      %802 = vmatpush1.bf16.xpose.msra.mxu0 0
      %803 = vmatprep.subr.bf16.mxu0 0
      %804 = vmatpush1.bf16.xpose.msra.mxu0 0
      %805 = vmatprep.subr.bf16.mxu0 0
      %806 = vmatpush1.bf16.xpose.msra.mxu0 0
      %807 = vmatprep.mubr.bf16.mxu0 %v730
      %808 = vmatmul.mubr.bf16.gmra.mrb[0].mxu0 %v729
      %v809 = vpop.f32.mrb[0].mxu0
      %v810 = vadd.f32 %v770, %v809
      %v811 = vpop.f32.mrb[0].mxu0
      %v812 = vpop.f32.mrb[0].mxu0
      %v813 = vpop.f32.mrb[0].mxu0
      %814 = vdwg.mxu0
      %815 = vst [vmem:[%s224] sm:$0x3] %v810
      %p816 = scmp.lt.s32.totalorder %s16, 1
      %s817 = scalar_select %p816, %s16, 1
      %s818 = smul.addr %s817, 2
      %s819 = scalar_lea.vmem %s5, %s818
      // Predicated region
      $region41: #{output_layer_forward.1} parent=39 // pred_check
        %p820 = pneg %p144
      $region42: #{output_layer_forward.1} parent=39 // pred_check_branch
        %822 = sbr.rel (%p820) target = $region44
      $region43: #{output_layer_forward.1} parent=39 // pred_region
        _
      $region44: #{output_layer_forward.1} parent=39 // pred_fallthru
        _
    $region40: #{output_layer_forward.1} parent=5 // pred_fallthru
      _
    %p823 = scmp.le.s32.totalorder 2, %s11
    // Predicated region
    $region45: #{output_layer_forward.1} parent=5 // pred_check
      %p824 = pneg %p823
    $region46: #{output_layer_forward.1} parent=5 // pred_check_branch
      %826 = sbr.rel (%p824) target = $region48
    $region47: #{output_layer_forward.1} parent=5 // pred_region
      %s827 = ssub.s32 %s11, 2
      // Predicated region
      $region49: #{output_layer_forward.1} parent=47 // pred_check
        %p828 = pneg %p150
      $region50: #{output_layer_forward.1} parent=47 // pred_check_branch
        %830 = sbr.rel (%p828) target = $region52
      $region51: #{output_layer_forward.1} parent=47 // pred_region
        %p831 = scmp.lt.s32.totalorder %s17, 1
        %s832 = scalar_select %p831, %s17, 1
        %s833 = smul.addr %s832, 2
        %s834 = scalar_lea.vmem %s5, %s833
      $region52: #{output_layer_forward.1} parent=47 // pred_fallthru
        _
    $region48: #{output_layer_forward.1} parent=5 // pred_fallthru
      _
  $region6: #{output_layer_forward.1} parent=0 // loop_footer
    %s15 = sadd.s32 1, %s11
  $region7: #{output_layer_forward.1} parent=0 // loop_footer_branch
    %10 = sbr.rel target = $region3
  $region8: #{output_layer_forward.1} parent=0 // loop_exit
    _

</llo_original>
